<compile_context>
chip_gen: v5e
topology: v5e:2x2
jax: 0.10.0
libtpu: 0.0.40
codegen_flags: <defaults>
</compile_context>

<pallas_src>
import jax
import jax.numpy as jnp
from jax.experimental import pallas as pl
from jax.experimental.pallas import tpu as pltpu


def _round_up(x, m):
    return ((x + m - 1) // m) * m


def _cdiv(a, b):
    return (a + b - 1) // b


def _lora_kernel(x_ref, a_ref, b_ref, o_ref):
    # x_ref: (tm, in_dim) bf16, a_ref: (in_dim, rank) bf16,
    # b_ref: (rank, tn) f32 with scale pre-folded, o_ref: (tm, tn) bf16.
    # First GEMM on the MXU with f32 accumulation.
    xa = jnp.dot(x_ref[...], a_ref[...], preferred_element_type=jnp.float32)
    # Second (tiny-K) GEMM in f32 (B already f32, scale already folded in).
    xab = jnp.dot(xa, b_ref[...], preferred_element_type=jnp.float32)
    o_ref[...] = xab.astype(o_ref.dtype)


def lora_forward(x, A, B, alpha, rank, *, tm=2048, tn=None):
    """x: (batch, seq, in_dim) bf16 -> (batch, seq, out_dim) bf16."""
    batch, seq, in_dim = x.shape
    rank_dim, out_dim = B.shape
    assert A.shape == (in_dim, rank_dim)

    M = batch * seq
    x2d = x.reshape(M, in_dim)
    scale = float(alpha) / float(rank)

    lane = 128
    m_align = 16  # bf16 packs 16 sublanes per vreg

    # Fold scale into the tiny resident B and pre-cast to f32 once (wrapper
    # cost is negligible; removes per-step VPU convert + f32 multiply).
    b_op = B.astype(jnp.float32) * scale

    # Lane handling: pad only when out_dim < 128 (otherwise every store would
    # be a masked partial vst); wider non-128-multiple widths stay unpadded
    # (block last dim == full array dim is legal) -> no post-kernel slice copy.
    if out_dim < lane:
        out_w = lane
        b_op = jnp.pad(b_op, ((0, 0), (0, lane - out_dim)))
        slice_out = True
    else:
        out_w = out_dim
        slice_out = False

    # ---- Generation-aware VMEM budget (leave headroom for Mosaic scratch) ---
    try:
        vmem_cap = int(pltpu.get_tpu_info().vmem_capacity_bytes)
    except Exception:
        vmem_cap = 64 << 20  # conservative (v7x per-TC) fallback
    budget = max(min(int(0.8 * vmem_cap), vmem_cap - (16 << 20)), 16 << 20)

    # ---- Row tile over M (ragged final block; no padding / slicing of M) ----
    if M <= m_align:
        tm = M  # block dim == full array dim -> exempt from the (8,128) rule
    else:
        tm = _round_up(min(tm, M), m_align)
        if _cdiv(M, tm) < 2:
            # Keep >=2 M steps so dimension_semantics=parallel can shard the
            # grid across both v7x TensorCores.
            tm = _round_up(_cdiv(M, 2), m_align)

    # ---- Column tile over out_dim ----
    if tn is None:
        tn = out_w
    else:
        tn = min(_round_up(tn, lane), out_w)

    x_item = jnp.dtype(x.dtype).itemsize
    a_item = jnp.dtype(A.dtype).itemsize
    o_item = jnp.dtype(x.dtype).itemsize
    b_item = jnp.dtype(jnp.float32).itemsize

    def _need(tm_, tn_):
        gn_ = _cdiv(out_w, tn_)
        n = (2 * tm_ * in_dim * x_item                      # x, double-buffered
             + 2 * tm_ * tn_ * o_item                       # out, double-buffered
             + in_dim * rank_dim * a_item                   # A (resident)
             + (2 if gn_ > 1 else 1) * rank_dim * tn_ * b_item)  # B (f32)
        return int(1.25 * n) + (2 << 20)

    # Shrink until the working set fits the budget: prefer N tiling (keeps tm
    # large so the ~0.35 us/step overhead stays amortized), then smaller tm.
    while _need(tm, tn) > budget:
        if tn > 512:
            tn = max(512, _round_up(tn // 2, lane))
        elif tm > 512:
            tm = max(512, _round_up(tm // 2, m_align))
        elif tn > lane:
            tn = max(lane, _round_up(tn // 2, lane))
        elif tm > m_align:
            tm = max(m_align, _round_up(tm // 2, m_align))
        else:
            break

    gm = _cdiv(M, tm)
    gn = _cdiv(out_w, tn)
    vmem_bytes = min(max(_need(tm, tn), 16 << 20), budget)

    # Advisory cost for XLA scheduling around the custom call.
    cost = pl.CostEstimate(
        flops=int(2 * M * in_dim * rank_dim + 2 * M * rank_dim * out_dim),
        transcendentals=0,
        bytes_accessed=int((M * in_dim + M * out_dim) * x_item
                           + in_dim * rank_dim * a_item
                           + rank_dim * out_dim * b_item),
    )

    out2d = pl.pallas_call(
        _lora_kernel,
        out_shape=jax.ShapeDtypeStruct((M, out_w), x.dtype),
        grid=(gm, gn),
        in_specs=[
            # x: tiled over M only; stays resident across the inner N sweep.
            pl.BlockSpec((tm, in_dim), lambda i, j: (i, 0)),
            # A: whole array, constant index -> resident in VMEM.
            pl.BlockSpec((in_dim, rank_dim), lambda i, j: (0, 0)),
            # B (f32, scale folded): tiled over out_dim only.
            pl.BlockSpec((rank_dim, tn), lambda i, j: (0, j)),
        ],
        out_specs=pl.BlockSpec((tm, tn), lambda i, j: (i, j)),
        compiler_params=pltpu.CompilerParams(
            dimension_semantics=("parallel", "parallel"),
            vmem_limit_bytes=vmem_bytes,
        ),
        cost_estimate=cost,
    )(x2d, A, b_op)

    if slice_out:
        out2d = out2d[:, :out_dim]
    return out2d.reshape(batch, seq, out_dim)


if __name__ == "__main__":
    # Module hyperparameters (synthetic, deterministic, small).
    in_dim, out_dim = 32, 32
    rank, alpha = 4, 8
    batch, seq = 2, 8
    dtype = jnp.bfloat16

    key = jax.random.PRNGKey(0)
    kx, ka, kb = jax.random.split(key, 3)

    # Parameter init mirrors LoRALayer.__init__:
    #   A = randn(in_dim, rank) / sqrt(rank)  (bf16),  B = zeros (bf16)
    std_dev = 1.0 / jnp.sqrt(jnp.float32(rank))
    A = (jax.random.normal(ka, (in_dim, rank), dtype=jnp.float32)
         * std_dev).astype(dtype)
    B_zero = jnp.zeros((rank, out_dim), dtype=dtype)

    x = jax.random.normal(kx, (batch, seq, in_dim),
                          dtype=jnp.float32).astype(dtype)

    # --- Check 1: stock LoRA init (B = 0) -> output must be exactly zero. ---
    out0 = lora_forward(x, A, B_zero, alpha, rank)
    jax.block_until_ready(out0)
    assert out0.shape == (batch, seq, out_dim)
    assert out0.dtype == dtype
    assert jnp.all(out0 == 0)

    # --- Check 2: nonzero B exercises both matmuls + folded scale + cast. ---
    B_rand = jax.random.normal(kb, (rank, out_dim),
                               dtype=jnp.float32).astype(dtype)
    out = lora_forward(x, A, B_rand, alpha, rank)
    jax.block_until_ready(out)

    ref = (alpha / rank) * (
        x.astype(jnp.float32) @ A.astype(jnp.float32) @ B_rand.astype(jnp.float32)
    )
    assert out.shape == (batch, seq, out_dim)
    assert out.dtype == dtype
    assert jnp.allclose(out.astype(jnp.float32), ref, atol=2e-2, rtol=2e-2)

    print("KERNEL_OK")
</pallas_src>

<mosaic_0001>
module attributes {stable_mosaic.version = 11 : i64} {
  func.func @_lora_kernel(%arg0: i32, %arg1: i32, %arg2: memref<16x32xbf16, #tpu.memory_space<vmem>>, %arg3: memref<32x4xbf16, #tpu.memory_space<vmem>>, %arg4: memref<4x128xf32, #tpu.memory_space<vmem>>, %arg5: memref<16x128xbf16, #tpu.memory_space<vmem>>) attributes {dimension_semantics = [#tpu.dimension_semantics<parallel>, #tpu.dimension_semantics<parallel>], iteration_bounds = array<i64: 1, 1>, scalar_prefetch = 0 : i64, scratch_operands = 0 : i64, tpu.core_type = #tpu.core_type<tc>, window_params = [{transform_indices = @transform_0, window_bounds = array<i64: 16, 32>}, {pipeline_mode = #tpu.pipeline_mode<synchronous>, transform_indices = @transform_1, window_bounds = array<i64: 32, 4>}, {transform_indices = @transform_2, window_bounds = array<i64: 4, 128>}, {transform_indices = @transform_3, window_bounds = array<i64: 16, 128>}]} {
    %c0 = arith.constant 0 : index
    %c0_0 = arith.constant 0 : index
    %0 = vector.load %arg2[%c0, %c0_0] : memref<16x32xbf16, #tpu.memory_space<vmem>>, vector<16x32xbf16>
    %c0_1 = arith.constant 0 : index
    %c0_2 = arith.constant 0 : index
    %1 = vector.load %arg3[%c0_1, %c0_2] : memref<32x4xbf16, #tpu.memory_space<vmem>>, vector<32x4xbf16>
    %cst = arith.constant dense<0.000000e+00> : vector<16x4xf32>
    %2 = tpu.matmul %0, %1, %cst {dimension_numbers = #tpu.dot_dimension_numbers<[1], [0], [0], [1], [0, 0, 1, 1], [], []>} : vector<16x32xbf16>, vector<32x4xbf16>, vector<16x4xf32> -> vector<16x4xf32>
    %c0_3 = arith.constant 0 : index
    %c0_4 = arith.constant 0 : index
    %3 = vector.load %arg4[%c0_3, %c0_4] : memref<4x128xf32, #tpu.memory_space<vmem>>, vector<4x128xf32>
    %cst_5 = arith.constant dense<0.000000e+00> : vector<16x128xf32>
    %4 = tpu.matmul %2, %3, %cst_5 {dimension_numbers = #tpu.dot_dimension_numbers<[1], [0], [0], [1], [0, 0, 1, 1], [], []>} : vector<16x4xf32>, vector<4x128xf32>, vector<16x128xf32> -> vector<16x128xf32>
    %5 = arith.truncf %4 : vector<16x128xf32> to vector<16x128xbf16>
    %c0_6 = arith.constant 0 : index
    %c0_7 = arith.constant 0 : index
    %6 = vector.load %arg5[%c0_6, %c0_7] : memref<16x128xbf16, #tpu.memory_space<vmem>>, vector<16x128xbf16>
    tpu.vector_store %arg5[%c0_6, %c0_7], %5 {strides = array<i32>} : memref<16x128xbf16, #tpu.memory_space<vmem>>, vector<16x128xbf16>,
    return
  }
  func.func @transform_0(%arg0: i32, %arg1: i32) -> (i32, i32) {
    %c0_i32 = arith.constant 0 : i32
    %c0_i32_0 = arith.constant 0 : i32
    return %arg0, %c0_i32 : i32, i32
  }
  func.func @transform_1(%arg0: i32, %arg1: i32) -> (i32, i32) {
    %c0_i32 = arith.constant 0 : i32
    %c0_i32_0 = arith.constant 0 : i32
    %c0_i32_1 = arith.constant 0 : i32
    return %c0_i32, %c0_i32_0 : i32, i32
  }
  func.func @transform_2(%arg0: i32, %arg1: i32) -> (i32, i32) {
    %c0_i32 = arith.constant 0 : i32
    %c0_i32_0 = arith.constant 0 : i32
    return %c0_i32, %arg1 : i32, i32
  }
  func.func @transform_3(%arg0: i32, %arg1: i32) -> (i32, i32) {
    %c0_i32 = arith.constant 0 : i32
    return %arg0, %arg1 : i32, i32
  }
}

</mosaic_0001>

<llo_original>
// kernel: tpu_custom_call.1
$region0: #{tpu_custom_call.1}
  #allocation0 [shape = 'u32[]', space=smem, size = 0x4, offset = 0x4, fixed_abs, tag = 'smem constant byte address 0x4 - core index']
  #allocation1 [shape = 'u32[72,128]{1,0:T(1,128)}', space=vmem, size = 0x9000, scoped, tag = 'internal scratch']
  %s0 = inlined_call_operand.vmem [shape: bf16[16,32], index: 0, kind: input, shape index: {}]
  %s1 = inlined_call_operand.vmem [shape: bf16[32,4], index: 1, kind: input, shape index: {}]
  %s2 = inlined_call_operand.vmem [shape: f32[4,128], index: 2, kind: input, shape index: {}]
  %s3 = inlined_call_operand.hbm [shape: bf16[16,128], index: 3, kind: output, shape index: {}]
  %s4 = sld [smem:[#allocation0]]
  $region22: #{tpu_custom_call.1} parent=0
    _
  %s6 = ssub.s32 1, %s4
  %s7 = scalar_select 0, %s6, %s4
  $region1: #{tpu_custom_call.1} parent=0
    #allocation2 [shape = 'u8[4096]{0}', space=vmem, size = 0x1000, scoped, tag = 'output window, operand 0, single buffered']
    #allocation3 [shape = 's32[1]{0}', space=sflag, size = 0x4, scoped, tag = 'scoped memory for tpu_custom_call.1']
    %8 = vsyncpa [#allocation3], 0
    // Predicated region
    $region2: #{tpu_custom_call.1} parent=1 // pred_check
      _
    $region3: #{tpu_custom_call.1} parent=1 // pred_check_branch
      %10 = sbr.rel (0) target = $region5
    $region4: #{tpu_custom_call.1} parent=1 // pred_region
      _
    $region5: #{tpu_custom_call.1} parent=1 // pred_fallthru
      _
    // Predicated region
    $region6: #{tpu_custom_call.1} parent=1 // pred_check
      _
    $region7: #{tpu_custom_call.1} parent=1 // pred_check_branch
      %12 = sbr.rel (0) target = $region9
    $region8: #{tpu_custom_call.1} parent=1 // pred_region
      _
    $region9: #{tpu_custom_call.1} parent=1 // pred_fallthru
      _
    // Predicated region
    $region10: #{tpu_custom_call.1} parent=1 // pred_check
      _
    $region11: #{tpu_custom_call.1} parent=1 // pred_check_branch
      %14 = sbr.rel (0) target = $region13
    $region12: #{tpu_custom_call.1} parent=1 // pred_region
      _
    $region13: #{tpu_custom_call.1} parent=1 // pred_fallthru
      _
    %v16 = vld [vmem:[%s0] sm:$0xf]
    %v17 = vld [vmem:[%s0 + $0x4] sm:$0xf]
    %v18 = vld [vmem:[%s1] sm:$0xf]
    %v19 = vld [vmem:[%s1 + $0x4] sm:$0xf]
    %v20 = vld [vmem:[%s1 + $0x8] sm:$0xf]
    %v21 = vld [vmem:[%s1 + $0xc] sm:$0xf]
    %v24 = vunpack.c.l.b16 %v16
    %v25 = vunpack.c.l.b16 %v17
    %v26 = vpack.c.b16 %v25, %v24
    %v31 = vunpack.c.l.b16 %v18
    %v32 = vunpack.c.l.b16 %v19
    %v33 = vunpack.c.l.b16 %v20
    %v34 = vunpack.c.l.b16 %v21
    %v35 = vpack.c.b16 %v32, %v31
    %v36 = vpack.c.b16 %v34, %v33
    %vm39 = vcmask 261120
    %v41 = vsel %vm39, %v26, 0
    %43 = vmatpush.bf16.msra.mxu0 0
    %44 = vmatpush.bf16.msra.mxu0 0
    %45 = vmatpush.bf16.msra.mxu0 0
    %46 = vmatpush.bf16.msra.mxu0 0
    %47 = vmatpush.bf16.msra.mxu0 0
    %48 = vmatpush.bf16.msra.mxu0 0
    %49 = vmatpush.bf16.msra.mxu0 %v36
    %50 = vmatpush.bf16.msra.mxu0 %v35
    %51 = vmatmul.bf16.gmra.mxu0 %v41
    %v52 = vpop.f32.mrf.mxu0
    %v53 = vadd.f32 0.0, %v52
    %v54 = vpop.f32.mrf.mxu0
    %v55 = vadd.f32 0.0, %v54
    %56 = vdwg.mxu0
    %v57 = vld [vmem:[%s2] sm:$0xf]
    %vm58 = vcmask 31744
    %v60 = vsel %vm58, %v53, 0
    %v63 = vsel %vm58, %v55, 0
    %vm65 = vcmask 1043456
    %v67 = vsel %vm65, %v57, 0
    %69 = vmatpush.msra.mxu0 0.0
    %70 = vmatpush.msra.mxu0 0.0
    %71 = vmatpush.msra.mxu0 0.0
    %72 = vmatpush.msra.mxu0 0.0
    %73 = vmatpush.msra.mxu0 0.0
    %74 = vmatpush.msra.mxu0 0.0
    %75 = vmatpush.msra.mxu0 0.0
    %76 = vmatpush.msra.mxu0 0.0
    %77 = vmatpush.msra.mxu0 0.0
    %78 = vmatpush.msra.mxu0 0.0
    %79 = vmatpush.msra.mxu0 0.0
    %80 = vmatpush.msra.mxu0 0.0
    %81 = vmatpush.msra.mxu0 0.0
    %82 = vmatpush.msra.mxu0 0.0
    %83 = vmatpush.msra.mxu0 0.0
    %84 = vmatpush.msra.mxu0 %v67
    %85 = vmatmul.f32.gmra.mxu0 %v60
    %v86 = vpop.f32.mrf.mxu0
    %v87 = vadd.f32 0.0, %v86
    %88 = vmatmul.f32.gmra.mxu0 %v63
    %v89 = vpop.f32.mrf.mxu0
    %v90 = vadd.f32 0.0, %v89
    %91 = vdwg.mxu0
    %v92 = vpack.c.bf16 %v87, %v87
    %v93 = vpack.c.bf16 %v90, %v90
    %94 = vst [vmem:[#allocation2] sm:$0xf] %v92
    %95 = vst [vmem:[#allocation2 + $0x4] sm:$0xf] %v93
    // Predicated region
    $region14: #{tpu_custom_call.1} parent=1 // pred_check
      _
    $region15: #{tpu_custom_call.1} parent=1 // pred_check_branch
      %97 = sbr.rel (0) target = $region17
    $region16: #{tpu_custom_call.1} parent=1 // pred_region
      %99 = vsyncadd [#allocation3], 0
      %s100 = sshll.u32 [#allocation2], 4
      %s101 = int_to_ptr.vmem [resolvable:$true] %s100
      %s102 = sshll.u32 %s3, 4
      %s103 = int_to_ptr.hbm [resolvable:$true] %s102
      %108 = dma.vmem_to_hbm [thread:$0]  %s101, 128, %s103, [#allocation3], 64, 64, 4
    $region17: #{tpu_custom_call.1} parent=1 // pred_fallthru
      _
    // Predicated region
    $region18: #{tpu_custom_call.1} parent=1 // pred_check
      _
    $region19: #{tpu_custom_call.1} parent=1 // pred_check_branch
      %110 = sbr.rel (0) target = $region21
    $region20: #{tpu_custom_call.1} parent=1 // pred_region
      %112 = dma.done [#allocation3], 128
    $region21: #{tpu_custom_call.1} parent=1 // pred_fallthru
      _
    %113 = vsyncpa [#allocation3], 1

</llo_original>
